<compile_context>
chip_gen: v6e
topology: v6e:2x2x1
jax: 0.10.0
libtpu: 0.0.40
codegen_flags: <defaults>
</compile_context>

<pallas_src>
import jax
import jax.numpy as jnp
from jax.experimental import pallas as pl
from jax.experimental.pallas import tpu as pltpu

# Hyperparameters (match the module's __init__ shapes).
MAX_LOC = 15                 # sample locations in [0, MAX_LOC]
L = MAX_LOC + 1              # one-hot width (num_classes) = 16
EMBED_DIM = 8                # embedding_dim
IN_DIM = L * EMBED_DIM       # inp_layer = 128 (flattened (L, E))
OUT_DIM = 64                 # out_layer  (2*OUT_DIM == 128 lanes -> pair packing)
NUM_EMBEDDING = 4            # only rows 0 and 1 are ever used (one-hot values are 0/1)
BATCH = 1024

PAIRS = L * L                # 256 distinct (loc[2i], loc[2i+1]) pairs
LANES = 2 * OUT_DIM          # 128-lane packed output row
TB_ROWS = 512                # batch rows per grid step (=> 256 pairs/step)


def _fwd_kernel(pidx_ref, tbl_ref, o_ref):
    """pidx: (tb2, 1) int32 pair index in [0, L*L);
    tbl: (L*L, 128) f32 pair table (resident across the grid);
    o:   (tb2, 128) f32 output block (lane-dense, unmasked store)."""
    tb2 = o_ref.shape[0]
    npairs = tbl_ref.shape[0]
    idx = pidx_ref[...]                                            # (tb2, 1)
    iota = jax.lax.broadcasted_iota(jnp.int32, (tb2, npairs), 1)   # (tb2, L*L)
    onehot = (iota == idx).astype(jnp.float32)
    o_ref[...] = jnp.dot(onehot, tbl_ref[...],
                         preferred_element_type=jnp.float32)


def sample_location_wide_model(sample_loc, embed_weight, fc_weight, fc_bias,
                               *, tb_rows=TB_ROWS, small_batch_threshold=64):
    """sample_loc: (B,) int, embed_weight: (NUM_EMBEDDING, E),
    fc_weight: (OUT, IN) (PyTorch Linear layout), fc_bias: (OUT,)."""
    B = sample_loc.shape[0]
    out_dim = fc_bias.shape[0]
    e_dim = embed_weight.shape[1]
    assert fc_weight.shape == (out_dim, L * e_dim)
    assert 2 * out_dim == LANES, "pair packing assumes out_layer == 64"

    # ---- one-time host-side weight transformation (constant-folds under jit)
    e0 = embed_weight[0].astype(jnp.float32)                    # (E,)
    e1 = embed_weight[1].astype(jnp.float32)                    # (E,)
    w = fc_weight.T.astype(jnp.float32)                         # (IN, OUT)
    bias = fc_bias.astype(jnp.float32)                          # (OUT,)

    const = jnp.tile(e0, L) @ w + bias                          # (OUT,)
    w3 = w.reshape(L, e_dim, out_dim)                           # (L, E, OUT)
    # full[l] == exact forward output for a sample at location l.
    full = jnp.einsum("e,leo->lo", e1 - e0, w3) + const[None, :]  # (L, OUT)

    # Clamp invalid locations (PyTorch one_hot would error; valid inputs unchanged).
    loc = jnp.clip(sample_loc.astype(jnp.int32), 0, L - 1)

    # Tiny-batch fast path: a 2 KiB gather; pallas_call launch cost dominates.
    if B < small_batch_threshold:
        return full[loc]

    # Pair table: row a*L+b = [full[a] | full[b]]  -> (256, 128) f32 = 128 KiB, resident.
    pair_tbl = jnp.concatenate(
        [jnp.repeat(full, L, axis=0), jnp.tile(full, (L, 1))], axis=1)

    # Pack two batch rows per output row.
    b2 = (B + 1) // 2 * 2
    if b2 != B:
        loc = jnp.pad(loc, (0, b2 - B))
    npair = b2 // 2
    pidx = loc[0::2] * L + loc[1::2]                            # (npair,)

    # Pairs per grid step: large lane-dense blocks, >=2 steps when batch allows
    # (so "parallel" shards across v7x's two TensorCores).
    tb2 = max(8, min(tb_rows // 2, pl.cdiv(npair, 8) * 8))
    np_pad = pl.cdiv(npair, tb2) * tb2
    if np_pad != npair:
        pidx = jnp.pad(pidx, (0, np_pad - npair))
    nb = np_pad // tb2
    pidx = pidx.reshape(np_pad, 1)

    out_pairs = pl.pallas_call(
        _fwd_kernel,
        out_shape=jax.ShapeDtypeStruct((np_pad, LANES), jnp.float32),
        grid_spec=pltpu.PrefetchScalarGridSpec(
            num_scalar_prefetch=0,
            grid=(nb,),
            in_specs=[
                pl.BlockSpec((tb2, 1), lambda i: (i, 0)),          # pair indices
                pl.BlockSpec((PAIRS, LANES), lambda i: (0, 0)),    # pair table, resident
            ],
            out_specs=pl.BlockSpec((tb2, LANES), lambda i: (i, 0)),
        ),
        compiler_params=pltpu.CompilerParams(dimension_semantics=("parallel",)),
    )(pidx, pair_tbl)

    out = out_pairs.reshape(2 * np_pad, out_dim)                # contiguous reshape
    if out.shape[0] != B:
        out = out[:B]
    return out


def _reference(sample_loc, embed_weight, fc_weight, fc_bias):
    """Pure-JAX reference mirroring the PyTorch forward."""
    oh = jax.nn.one_hot(sample_loc, L, dtype=jnp.int32)          # (B, L) values 0/1
    emb = embed_weight[oh]                                       # (B, L, E)
    flat = emb.reshape(sample_loc.shape[0], -1)                  # (B, L*E)
    return flat @ fc_weight.T + fc_bias


if __name__ == "__main__":
    key = jax.random.PRNGKey(0)
    k_emb, k_w, k_b, k_loc = jax.random.split(key, 4)

    # Deterministic synthetic parameters (shapes from the module's __init__).
    embed_weight = jax.random.normal(k_emb, (NUM_EMBEDDING, EMBED_DIM), jnp.float32)
    bound = 1.0 / (IN_DIM ** 0.5)
    fc_weight = jax.random.uniform(k_w, (OUT_DIM, IN_DIM), jnp.float32, -bound, bound)
    fc_bias = jax.random.uniform(k_b, (OUT_DIM,), jnp.float32, -bound, bound)

    # Main check: vectorized Pallas path (multi-step "parallel" grid).
    sample_loc = jax.random.randint(k_loc, (BATCH,), 0, L, jnp.int32)
    out = sample_location_wide_model(sample_loc, embed_weight, fc_weight, fc_bias)
    out = jax.block_until_ready(out)
    ref = _reference(sample_loc, embed_weight, fc_weight, fc_bias)
    assert out.shape == (BATCH, OUT_DIM)
    assert jnp.allclose(out, ref, atol=2e-5, rtol=1e-5), "mismatch vs reference (large B)"

    # Odd, tiny batch forced through the Pallas path (exercises pair/grid padding).
    loc_small = jax.random.randint(jax.random.PRNGKey(1), (9,), 0, L, jnp.int32)
    out_s = sample_location_wide_model(loc_small, embed_weight, fc_weight, fc_bias,
                                       small_batch_threshold=0)
    out_s = jax.block_until_ready(out_s)
    ref_s = _reference(loc_small, embed_weight, fc_weight, fc_bias)
    assert out_s.shape == (9, OUT_DIM)
    assert jnp.allclose(out_s, ref_s, atol=2e-5, rtol=1e-5), "mismatch vs reference (small B)"

    print("KERNEL_OK")
</pallas_src>

<mosaic_0001>
module attributes {stable_mosaic.version = 11 : i64} {
  func.func @_fwd_kernel(%arg0: i32, %arg1: memref<256x1xi32, #tpu.memory_space<vmem>>, %arg2: memref<256x128xf32, #tpu.memory_space<vmem>>, %arg3: memref<256x128xf32, #tpu.memory_space<vmem>>) attributes {dimension_semantics = [#tpu.dimension_semantics<parallel>], iteration_bounds = array<i64: 2>, scalar_prefetch = 0 : i64, scratch_operands = 0 : i64, tpu.core_type = #tpu.core_type<tc>, window_params = [{transform_indices = @transform_0, window_bounds = array<i64: 256, 1>}, {pipeline_mode = #tpu.pipeline_mode<synchronous>, transform_indices = @transform_1, window_bounds = array<i64: 256, 128>}, {transform_indices = @transform_2, window_bounds = array<i64: 256, 128>}]} {
    %c0 = arith.constant 0 : index
    %c0_0 = arith.constant 0 : index
    %0 = vector.load %arg1[%c0, %c0_0] : memref<256x1xi32, #tpu.memory_space<vmem>>, vector<256x1xi32>
    %1 = tpu.iota {dimensions = array<i32: 1>} : vector<256x256xi32>
    %2 = vector.broadcast %0 : vector<256x1xi32> to vector<256x256xi32>
    %3 = arith.cmpi eq, %1, %2 : vector<256x256xi32>
    %4 = arith.extui %3 : vector<256x256xi1> to vector<256x256xi32>
    %5 = arith.sitofp %4 : vector<256x256xi32> to vector<256x256xf32>
    %c0_1 = arith.constant 0 : index
    %c0_2 = arith.constant 0 : index
    %6 = vector.load %arg2[%c0_1, %c0_2] : memref<256x128xf32, #tpu.memory_space<vmem>>, vector<256x128xf32>
    %cst = arith.constant dense<0.000000e+00> : vector<256x128xf32>
    %7 = tpu.matmul %5, %6, %cst {dimension_numbers = #tpu.dot_dimension_numbers<[1], [0], [0], [1], [0, 0, 1, 1], [], []>} : vector<256x256xf32>, vector<256x128xf32>, vector<256x128xf32> -> vector<256x128xf32>
    %c0_3 = arith.constant 0 : index
    %c0_4 = arith.constant 0 : index
    %8 = vector.load %arg3[%c0_3, %c0_4] : memref<256x128xf32, #tpu.memory_space<vmem>>, vector<256x128xf32>
    tpu.vector_store %arg3[%c0_3, %c0_4], %7 {strides = array<i32>} : memref<256x128xf32, #tpu.memory_space<vmem>>, vector<256x128xf32>,
    return
  }
  func.func @transform_0(%arg0: i32) -> (i32, i32) {
    %c0_i32 = arith.constant 0 : i32
    %c0_i32_0 = arith.constant 0 : i32
    return %arg0, %c0_i32 : i32, i32
  }
  func.func @transform_1(%arg0: i32) -> (i32, i32) {
    %c0_i32 = arith.constant 0 : i32
    %c0_i32_0 = arith.constant 0 : i32
    %c0_i32_1 = arith.constant 0 : i32
    return %c0_i32, %c0_i32_0 : i32, i32
  }
  func.func @transform_2(%arg0: i32) -> (i32, i32) {
    %c0_i32 = arith.constant 0 : i32
    %c0_i32_0 = arith.constant 0 : i32
    return %arg0, %c0_i32 : i32, i32
  }
}

</mosaic_0001>

<llo_original>
// kernel: tpu_custom_call.1
$region0: #{tpu_custom_call.1}
  #allocation0 [shape = 'u32[]', space=smem, size = 0x4, offset = 0x4, fixed_abs, tag = 'smem constant byte address 0x4 - core index']
  #allocation1 [shape = 'u32[144,128]{1,0:T(1,128)}', space=vmem, size = 0x12000, scoped, tag = 'internal scratch']
  %s0 = inlined_call_operand.vmem [shape: s32[512,1], index: 0, kind: input, shape index: {}]
  %s1 = inlined_call_operand.vmem [shape: f32[256,128], index: 1, kind: input, shape index: {}]
  %s2 = inlined_call_operand.hbm [shape: f32[512,128], index: 2, kind: output, shape index: {}]
  %s3 = sld [smem:[#allocation0]]
  $region41: #{tpu_custom_call.1} parent=0
    _
  %s5 = ssub.s32 1, %s3
  %s6 = scalar_select 0, %s5, %s3
  $region1: #{tpu_custom_call.1} parent=0
    #allocation2 [shape = 'u8[262144]{0}', space=vmem, size = 0x40000, scoped, tag = 'output window, operand 0']
    #allocation3 [shape = 's32[2]{0}', space=sflag, size = 0x8, scoped, tag = 'scoped memory for tpu_custom_call.1']
    %7 = vsyncpa [#allocation3], 0
    %s8 = scalar_lea.sflag [#allocation3], 1
    %9 = vsyncpa %s8, 0
    loop: start=0, step=1, limit=4
    $region2: #{tpu_custom_call.1} parent=1 // loop_pre_header
      _
    $region3: #{tpu_custom_call.1} parent=1 // loop_header
      %s11 = sphi 0, %s15
      %p12 = scmp.ge.s32.totalorder %s11, 4
      %s21 = sphi 0, %s23
      %s24 = sphi 0, %s21
      %s25 = sphi 0, %s24
      %s41 = sphi 0, %s25
      %s45 = sphi 0, %s45
      %s47 = sphi 0, %s45
      %s48 = sphi 0, %s47
      %s62 = sphi 0, %s48
      %s68 = sphi 0, %s70
      %s71 = sphi 0, %s68
      %s72 = sphi 0, %s71
      %s88 = sphi 0, %s72
    $region4: #{tpu_custom_call.1} parent=1 // loop_header_branch
      %14 = sbr.rel (%p12) target = $region8
    $region5: #{tpu_custom_call.1} parent=1 // loop_body
      %s16 = ssub.s32 %s11, 1
      %s17 = ssub.s32 %s11, 2
      %s18 = sadd.s32 %s11, 1
      %s19 = ssub.s32 %s11, %s18
      %p20 = scmp.eq.s32.totalorder %s19, 0
      %s22 = sadd.s32 %s21, 1
      %s23 = scalar_select %p20, %s21, %s22
      %p26 = pneg %p20
      %p27 = scmp.eq.s32.totalorder %s11, 1
      %p28 = por %p26, %p27
      %p29 = scmp.ne.s32.totalorder %s21, %s24
      %p30 = scmp.eq.s32.totalorder %s11, 0
      %p31 = por %p29, %p30
      %p32 = scmp.ne.s32.totalorder %s21, %s24
      %p33 = scmp.eq.s32.totalorder %s16, 1
      %p34 = por %p32, %p33
      %p35 = scmp.ne.s32.totalorder %s24, %s25
      %p36 = scmp.eq.s32.totalorder %s16, 0
      %p37 = por %p35, %p36
      %p38 = scmp.ne.s32.totalorder %s24, %s25
      %p39 = scmp.eq.s32.totalorder %s17, 1
      %p40 = por %p38, %p39
      %p42 = scmp.ne.s32.totalorder %s25, %s41
      %p43 = scmp.eq.s32.totalorder %s17, 0
      %p44 = por %p42, %p43
      %s46 = sadd.s32 %s45, 1
      %p49 = scmp.eq.s32.totalorder %s11, 1
      %p50 = scmp.ne.s32.totalorder %s45, %s47
      %p51 = scmp.eq.s32.totalorder %s11, 0
      %p52 = por %p50, %p51
      %p53 = scmp.ne.s32.totalorder %s45, %s47
      %p54 = scmp.eq.s32.totalorder %s16, 1
      %p55 = por %p53, %p54
      %p56 = scmp.ne.s32.totalorder %s47, %s48
      %p57 = scmp.eq.s32.totalorder %s16, 0
      %p58 = por %p56, %p57
      %p59 = scmp.ne.s32.totalorder %s47, %s48
      %p60 = scmp.eq.s32.totalorder %s17, 1
      %p61 = por %p59, %p60
      %p63 = scmp.ne.s32.totalorder %s48, %s62
      %p64 = scmp.eq.s32.totalorder %s17, 0
      %p65 = por %p63, %p64
      %s66 = ssub.s32 %s11, %s18
      %p67 = scmp.eq.s32.totalorder %s66, 0
      %s69 = sadd.s32 %s68, 1
      %s70 = scalar_select %p67, %s68, %s69
      %p73 = pneg %p67
      %p74 = scmp.eq.s32.totalorder %s11, 1
      %p75 = por %p73, %p74
      %p76 = scmp.ne.s32.totalorder %s68, %s71
      %p77 = scmp.eq.s32.totalorder %s11, 0
      %p78 = por %p76, %p77
      %p79 = scmp.ne.s32.totalorder %s68, %s71
      %p80 = scmp.eq.s32.totalorder %s16, 1
      %p81 = por %p79, %p80
      %p82 = scmp.ne.s32.totalorder %s71, %s72
      %p83 = scmp.eq.s32.totalorder %s16, 0
      %p84 = por %p82, %p83
      %p85 = scmp.ne.s32.totalorder %s71, %s72
      %p86 = scmp.eq.s32.totalorder %s17, 1
      %p87 = por %p85, %p86
      %p89 = scmp.ne.s32.totalorder %s72, %s88
      %p90 = scmp.eq.s32.totalorder %s17, 0
      %p91 = por %p89, %p90
      %p92 = scmp.le.s32.totalorder 1, %s11
      %p93 = scmp.lt.s32.totalorder %s11, 3
      %p94 = pnand %p92, %p93
      %p95 = pneg %p94
      // Predicated region
      $region9: #{tpu_custom_call.1} parent=5 // pred_check
        _
      $region10: #{tpu_custom_call.1} parent=5 // pred_check_branch
        %97 = sbr.rel (%p94) target = $region12
      $region11: #{tpu_custom_call.1} parent=5 // pred_region
        %s98 = ssub.s32 %s11, 1
        // Predicated region
        $region13: #{tpu_custom_call.1} parent=11 // pred_check
          %p99 = pneg %p58
        $region14: #{tpu_custom_call.1} parent=11 // pred_check_branch
          %101 = sbr.rel (%p99) target = $region16
        $region15: #{tpu_custom_call.1} parent=11 // pred_region
          _
        $region16: #{tpu_custom_call.1} parent=11 // pred_fallthru
          _
      $region12: #{tpu_custom_call.1} parent=5 // pred_fallthru
        _
      %p102 = scmp.lt.s32.totalorder %s11, 2
      // Predicated region
      $region17: #{tpu_custom_call.1} parent=5 // pred_check
        %p103 = pneg %p102
      $region18: #{tpu_custom_call.1} parent=5 // pred_check_branch
        %105 = sbr.rel (%p103) target = $region20
      $region19: #{tpu_custom_call.1} parent=5 // pred_region
        // Predicated region
        $region21: #{tpu_custom_call.1} parent=19 // pred_check
          %p106 = pneg %p31
        $region22: #{tpu_custom_call.1} parent=19 // pred_check_branch
          %108 = sbr.rel (%p106) target = $region24
        $region23: #{tpu_custom_call.1} parent=19 // pred_region
          %s109 = smul.u32 32, %s11
          %p110 = scmp.lt.s32.totalorder %s109, 63
          %s111 = scalar_select %p110, %s109, 63
          %s112 = smul.addr %s111, 8
          %s113 = scalar_lea.vmem %s0, %s112
          %s114 = smul.u32 32, %s11
        $region24: #{tpu_custom_call.1} parent=19 // pred_fallthru
          _
      $region20: #{tpu_custom_call.1} parent=5 // pred_fallthru
        _
      %p115 = scmp.le.s32.totalorder 1, %s11
      %p116 = scmp.lt.s32.totalorder %s11, 3
      %p117 = pnand %p115, %p116
      %p118 = pneg %p117
      // Predicated region
      $region25: #{tpu_custom_call.1} parent=5 // pred_check
        _
      $region26: #{tpu_custom_call.1} parent=5 // pred_check_branch
        %120 = sbr.rel (%p117) target = $region28
      $region27: #{tpu_custom_call.1} parent=5 // pred_region
        %s121 = ssub.s32 %s11, 1
        %s122 = smul.u32 32, %s16
        %p123 = scmp.lt.s32.totalorder %s122, 63
        %s124 = scalar_select %p123, %s122, 63
        %s125 = smul.addr %s124, 8
        %s126 = scalar_lea.vmem %s0, %s125
        %p127 = pneg %p37
        %p128 = pneg %p34
        %p129 = pneg %p58
        %p130 = pneg %p55
        %p131 = pneg %p84
        %p132 = pneg %p81
        %s133 = sand.u32 %s71, 1
        %s134 = scalar_lea.sflag [#allocation3], %s133
        %s135 = sand.u32 %s71, 1
        %s136 = smul.addr %s135, 256
        %s137 = scalar_lea.vmem [#allocation2], %s136
        %s138 = smul.u32 32, %s16
        %p139 = scmp.lt.s32.totalorder %s138, 63
        %s140 = scalar_select %p139, %s138, 63
        %s141 = smul.addr %s140, 8
        %s142 = scalar_lea.vmem %s0, %s141
        %s143 = smul.u32 32, %s16
        %s144 = smul.u32 32, %s16
        %v145 = vld [vmem:[%s142] sm:$0xff]
        %v146 = vld [vmem:[%s142 + $0x8] sm:$0xff]
        %v147 = vld [vmem:[%s142 + $0x10] sm:$0xff]
        %v148 = vld [vmem:[%s142 + $0x18] sm:$0xff]
        %v149 = vld [vmem:[%s142 + $0x20] sm:$0xff]
        %v150 = vld [vmem:[%s142 + $0x28] sm:$0xff]
        %v151 = vld [vmem:[%s142 + $0x30] sm:$0xff]
        %v152 = vld [vmem:[%s142 + $0x38] sm:$0xff]
        %v153 = vld [vmem:[%s142 + $0x40] sm:$0xff]
        %v154 = vld [vmem:[%s142 + $0x48] sm:$0xff]
        %v155 = vld [vmem:[%s142 + $0x50] sm:$0xff]
        %v156 = vld [vmem:[%s142 + $0x58] sm:$0xff]
        %v157 = vld [vmem:[%s142 + $0x60] sm:$0xff]
        %v158 = vld [vmem:[%s142 + $0x68] sm:$0xff]
        %v159 = vld [vmem:[%s142 + $0x70] sm:$0xff]
        %v160 = vld [vmem:[%s142 + $0x78] sm:$0xff]
        %v161 = vld [vmem:[%s142 + $0x80] sm:$0xff]
        %v162 = vld [vmem:[%s142 + $0x88] sm:$0xff]
        %v163 = vld [vmem:[%s142 + $0x90] sm:$0xff]
        %v164 = vld [vmem:[%s142 + $0x98] sm:$0xff]
        %v165 = vld [vmem:[%s142 + $0xa0] sm:$0xff]
        %v166 = vld [vmem:[%s142 + $0xa8] sm:$0xff]
        %v167 = vld [vmem:[%s142 + $0xb0] sm:$0xff]
        %v168 = vld [vmem:[%s142 + $0xb8] sm:$0xff]
        %v169 = vld [vmem:[%s142 + $0xc0] sm:$0xff]
        %v170 = vld [vmem:[%s142 + $0xc8] sm:$0xff]
        %v171 = vld [vmem:[%s142 + $0xd0] sm:$0xff]
        %v172 = vld [vmem:[%s142 + $0xd8] sm:$0xff]
        %v173 = vld [vmem:[%s142 + $0xe0] sm:$0xff]
        %v174 = vld [vmem:[%s142 + $0xe8] sm:$0xff]
        %v175 = vld [vmem:[%s142 + $0xf0] sm:$0xff]
        %v176 = vld [vmem:[%s142 + $0xf8] sm:$0xff]
        %v177 = vlaneseq
        %v178 = vand.u32 %v177, 127
        %v179 = vadd.s32 %v178, 128
        %180 = vset.pattern.permute.xlu0 0
        %181 = vperm.xlu0 %180, %v145
        %v182 = vpop.permute.xlu0 %181
        %183 = vset.pattern.permute.xlu0 0
        %184 = vperm.xlu0 %183, %v146
        %v185 = vpop.permute.xlu0 %184
        %186 = vset.pattern.permute.xlu0 0
        %187 = vperm.xlu0 %186, %v147
        %v188 = vpop.permute.xlu0 %187
        %189 = vset.pattern.permute.xlu0 0
        %190 = vperm.xlu0 %189, %v148
        %v191 = vpop.permute.xlu0 %190
        %192 = vset.pattern.permute.xlu0 0
        %193 = vperm.xlu0 %192, %v149
        %v194 = vpop.permute.xlu0 %193
        %195 = vset.pattern.permute.xlu0 0
        %196 = vperm.xlu0 %195, %v150
        %v197 = vpop.permute.xlu0 %196
        %198 = vset.pattern.permute.xlu0 0
        %199 = vperm.xlu0 %198, %v151
        %v200 = vpop.permute.xlu0 %199
        %201 = vset.pattern.permute.xlu0 0
        %202 = vperm.xlu0 %201, %v152
        %v203 = vpop.permute.xlu0 %202
        %204 = vset.pattern.permute.xlu0 0
        %205 = vperm.xlu0 %204, %v153
        %v206 = vpop.permute.xlu0 %205
        %207 = vset.pattern.permute.xlu0 0
        %208 = vperm.xlu0 %207, %v154
        %v209 = vpop.permute.xlu0 %208
        %210 = vset.pattern.permute.xlu0 0
        %211 = vperm.xlu0 %210, %v155
        %v212 = vpop.permute.xlu0 %211
        %213 = vset.pattern.permute.xlu0 0
        %214 = vperm.xlu0 %213, %v156
        %v215 = vpop.permute.xlu0 %214
        %216 = vset.pattern.permute.xlu0 0
        %217 = vperm.xlu0 %216, %v157
        %v218 = vpop.permute.xlu0 %217
        %219 = vset.pattern.permute.xlu0 0
        %220 = vperm.xlu0 %219, %v158
        %v221 = vpop.permute.xlu0 %220
        %222 = vset.pattern.permute.xlu0 0
        %223 = vperm.xlu0 %222, %v159
        %v224 = vpop.permute.xlu0 %223
        %225 = vset.pattern.permute.xlu0 0
        %226 = vperm.xlu0 %225, %v160
        %v227 = vpop.permute.xlu0 %226
        %228 = vset.pattern.permute.xlu0 0
        %229 = vperm.xlu0 %228, %v161
        %v230 = vpop.permute.xlu0 %229
        %231 = vset.pattern.permute.xlu0 0
        %232 = vperm.xlu0 %231, %v162
        %v233 = vpop.permute.xlu0 %232
        %234 = vset.pattern.permute.xlu0 0
        %235 = vperm.xlu0 %234, %v163
        %v236 = vpop.permute.xlu0 %235
        %237 = vset.pattern.permute.xlu0 0
        %238 = vperm.xlu0 %237, %v164
        %v239 = vpop.permute.xlu0 %238
        %240 = vset.pattern.permute.xlu0 0
        %241 = vperm.xlu0 %240, %v165
        %v242 = vpop.permute.xlu0 %241
        %243 = vset.pattern.permute.xlu0 0
        %244 = vperm.xlu0 %243, %v166
        %v245 = vpop.permute.xlu0 %244
        %246 = vset.pattern.permute.xlu0 0
        %247 = vperm.xlu0 %246, %v167
        %v248 = vpop.permute.xlu0 %247
        %249 = vset.pattern.permute.xlu0 0
        %250 = vperm.xlu0 %249, %v168
        %v251 = vpop.permute.xlu0 %250
        %252 = vset.pattern.permute.xlu0 0
        %253 = vperm.xlu0 %252, %v169
        %v254 = vpop.permute.xlu0 %253
        %255 = vset.pattern.permute.xlu0 0
        %256 = vperm.xlu0 %255, %v170
        %v257 = vpop.permute.xlu0 %256
        %258 = vset.pattern.permute.xlu0 0
        %259 = vperm.xlu0 %258, %v171
        %v260 = vpop.permute.xlu0 %259
        %261 = vset.pattern.permute.xlu0 0
        %262 = vperm.xlu0 %261, %v172
        %v263 = vpop.permute.xlu0 %262
        %264 = vset.pattern.permute.xlu0 0
        %265 = vperm.xlu0 %264, %v173
        %v266 = vpop.permute.xlu0 %265
        %267 = vset.pattern.permute.xlu0 0
        %268 = vperm.xlu0 %267, %v174
        %v269 = vpop.permute.xlu0 %268
        %270 = vset.pattern.permute.xlu0 0
        %271 = vperm.xlu0 %270, %v175
        %v272 = vpop.permute.xlu0 %271
        %273 = vset.pattern.permute.xlu0 0
        %274 = vperm.xlu0 %273, %v176
        %v275 = vpop.permute.xlu0 %274
        %vm276 = vcmp.eq.s32.totalorder %v178, %v182
        %vm277 = vcmp.eq.s32.totalorder %v179, %v182
        %vm278 = vcmp.eq.s32.totalorder %v178, %v185
        %vm279 = vcmp.eq.s32.totalorder %v179, %v185
        %vm280 = vcmp.eq.s32.totalorder %v178, %v188
        %vm281 = vcmp.eq.s32.totalorder %v179, %v188
        %vm282 = vcmp.eq.s32.totalorder %v178, %v191
        %vm283 = vcmp.eq.s32.totalorder %v179, %v191
        %vm284 = vcmp.eq.s32.totalorder %v178, %v194
        %vm285 = vcmp.eq.s32.totalorder %v179, %v194
        %vm286 = vcmp.eq.s32.totalorder %v178, %v197
        %vm287 = vcmp.eq.s32.totalorder %v179, %v197
        %vm288 = vcmp.eq.s32.totalorder %v178, %v200
        %vm289 = vcmp.eq.s32.totalorder %v179, %v200
        %vm290 = vcmp.eq.s32.totalorder %v178, %v203
        %vm291 = vcmp.eq.s32.totalorder %v179, %v203
        %vm292 = vcmp.eq.s32.totalorder %v178, %v206
        %vm293 = vcmp.eq.s32.totalorder %v179, %v206
        %vm294 = vcmp.eq.s32.totalorder %v178, %v209
        %vm295 = vcmp.eq.s32.totalorder %v179, %v209
        %vm296 = vcmp.eq.s32.totalorder %v178, %v212
        %vm297 = vcmp.eq.s32.totalorder %v179, %v212
        %vm298 = vcmp.eq.s32.totalorder %v178, %v215
        %vm299 = vcmp.eq.s32.totalorder %v179, %v215
        %vm300 = vcmp.eq.s32.totalorder %v178, %v218
        %vm301 = vcmp.eq.s32.totalorder %v179, %v218
        %vm302 = vcmp.eq.s32.totalorder %v178, %v221
        %vm303 = vcmp.eq.s32.totalorder %v179, %v221
        %vm304 = vcmp.eq.s32.totalorder %v178, %v224
        %vm305 = vcmp.eq.s32.totalorder %v179, %v224
        %vm306 = vcmp.eq.s32.totalorder %v178, %v227
        %vm307 = vcmp.eq.s32.totalorder %v179, %v227
        %vm308 = vcmp.eq.s32.totalorder %v178, %v230
        %vm309 = vcmp.eq.s32.totalorder %v179, %v230
        %vm310 = vcmp.eq.s32.totalorder %v178, %v233
        %vm311 = vcmp.eq.s32.totalorder %v179, %v233
        %vm312 = vcmp.eq.s32.totalorder %v178, %v236
        %vm313 = vcmp.eq.s32.totalorder %v179, %v236
        %vm314 = vcmp.eq.s32.totalorder %v178, %v239
        %vm315 = vcmp.eq.s32.totalorder %v179, %v239
        %vm316 = vcmp.eq.s32.totalorder %v178, %v242
        %vm317 = vcmp.eq.s32.totalorder %v179, %v242
        %vm318 = vcmp.eq.s32.totalorder %v178, %v245
        %vm319 = vcmp.eq.s32.totalorder %v179, %v245
        %vm320 = vcmp.eq.s32.totalorder %v178, %v248
        %vm321 = vcmp.eq.s32.totalorder %v179, %v248
        %vm322 = vcmp.eq.s32.totalorder %v178, %v251
        %vm323 = vcmp.eq.s32.totalorder %v179, %v251
        %vm324 = vcmp.eq.s32.totalorder %v178, %v254
        %vm325 = vcmp.eq.s32.totalorder %v179, %v254
        %vm326 = vcmp.eq.s32.totalorder %v178, %v257
        %vm327 = vcmp.eq.s32.totalorder %v179, %v257
        %vm328 = vcmp.eq.s32.totalorder %v178, %v260
        %vm329 = vcmp.eq.s32.totalorder %v179, %v260
        %vm330 = vcmp.eq.s32.totalorder %v178, %v263
        %vm331 = vcmp.eq.s32.totalorder %v179, %v263
        %vm332 = vcmp.eq.s32.totalorder %v178, %v266
        %vm333 = vcmp.eq.s32.totalorder %v179, %v266
        %vm334 = vcmp.eq.s32.totalorder %v178, %v269
        %vm335 = vcmp.eq.s32.totalorder %v179, %v269
        %vm336 = vcmp.eq.s32.totalorder %v178, %v272
        %vm337 = vcmp.eq.s32.totalorder %v179, %v272
        %vm338 = vcmp.eq.s32.totalorder %v178, %v275
        %vm339 = vcmp.eq.s32.totalorder %v179, %v275
        %v340 = vsel %vm276, 1, 0
        %v341 = vsel %vm277, 1, 0
        %v342 = vsel %vm278, 1, 0
        %v343 = vsel %vm279, 1, 0
        %v344 = vsel %vm280, 1, 0
        %v345 = vsel %vm281, 1, 0
        %v346 = vsel %vm282, 1, 0
        %v347 = vsel %vm283, 1, 0
        %v348 = vsel %vm284, 1, 0
        %v349 = vsel %vm285, 1, 0
        %v350 = vsel %vm286, 1, 0
        %v351 = vsel %vm287, 1, 0
        %v352 = vsel %vm288, 1, 0
        %v353 = vsel %vm289, 1, 0
        %v354 = vsel %vm290, 1, 0
        %v355 = vsel %vm291, 1, 0
        %v356 = vsel %vm292, 1, 0
        %v357 = vsel %vm293, 1, 0
        %v358 = vsel %vm294, 1, 0
        %v359 = vsel %vm295, 1, 0
        %v360 = vsel %vm296, 1, 0
        %v361 = vsel %vm297, 1, 0
        %v362 = vsel %vm298, 1, 0
        %v363 = vsel %vm299, 1, 0
        %v364 = vsel %vm300, 1, 0
        %v365 = vsel %vm301, 1, 0
        %v366 = vsel %vm302, 1, 0
        %v367 = vsel %vm303, 1, 0
        %v368 = vsel %vm304, 1, 0
        %v369 = vsel %vm305, 1, 0
        %v370 = vsel %vm306, 1, 0
        %v371 = vsel %vm307, 1, 0
        %v372 = vsel %vm308, 1, 0
        %v373 = vsel %vm309, 1, 0
        %v374 = vsel %vm310, 1, 0
        %v375 = vsel %vm311, 1, 0
        %v376 = vsel %vm312, 1, 0
        %v377 = vsel %vm313, 1, 0
        %v378 = vsel %vm314, 1, 0
        %v379 = vsel %vm315, 1, 0
        %v380 = vsel %vm316, 1, 0
        %v381 = vsel %vm317, 1, 0
        %v382 = vsel %vm318, 1, 0
        %v383 = vsel %vm319, 1, 0
        %v384 = vsel %vm320, 1, 0
        %v385 = vsel %vm321, 1, 0
        %v386 = vsel %vm322, 1, 0
        %v387 = vsel %vm323, 1, 0
        %v388 = vsel %vm324, 1, 0
        %v389 = vsel %vm325, 1, 0
        %v390 = vsel %vm326, 1, 0
        %v391 = vsel %vm327, 1, 0
        %v392 = vsel %vm328, 1, 0
        %v393 = vsel %vm329, 1, 0
        %v394 = vsel %vm330, 1, 0
        %v395 = vsel %vm331, 1, 0
        %v396 = vsel %vm332, 1, 0
        %v397 = vsel %vm333, 1, 0
        %v398 = vsel %vm334, 1, 0
        %v399 = vsel %vm335, 1, 0
        %v400 = vsel %vm336, 1, 0
        %v401 = vsel %vm337, 1, 0
        %v402 = vsel %vm338, 1, 0
        %v403 = vsel %vm339, 1, 0
        %v404 = vcvt.s32.f32 %v340
        %v405 = vcvt.s32.f32 %v341
        %v406 = vcvt.s32.f32 %v342
        %v407 = vcvt.s32.f32 %v343
        %v408 = vcvt.s32.f32 %v344
        %v409 = vcvt.s32.f32 %v345
        %v410 = vcvt.s32.f32 %v346
        %v411 = vcvt.s32.f32 %v347
        %v412 = vcvt.s32.f32 %v348
        %v413 = vcvt.s32.f32 %v349
        %v414 = vcvt.s32.f32 %v350
        %v415 = vcvt.s32.f32 %v351
        %v416 = vcvt.s32.f32 %v352
        %v417 = vcvt.s32.f32 %v353
        %v418 = vcvt.s32.f32 %v354
        %v419 = vcvt.s32.f32 %v355
        %v420 = vcvt.s32.f32 %v356
        %v421 = vcvt.s32.f32 %v357
        %v422 = vcvt.s32.f32 %v358
        %v423 = vcvt.s32.f32 %v359
        %v424 = vcvt.s32.f32 %v360
        %v425 = vcvt.s32.f32 %v361
        %v426 = vcvt.s32.f32 %v362
        %v427 = vcvt.s32.f32 %v363
        %v428 = vcvt.s32.f32 %v364
        %v429 = vcvt.s32.f32 %v365
        %v430 = vcvt.s32.f32 %v366
        %v431 = vcvt.s32.f32 %v367
        %v432 = vcvt.s32.f32 %v368
        %v433 = vcvt.s32.f32 %v369
        %v434 = vcvt.s32.f32 %v370
        %v435 = vcvt.s32.f32 %v371
        %v436 = vcvt.s32.f32 %v372
        %v437 = vcvt.s32.f32 %v373
        %v438 = vcvt.s32.f32 %v374
        %v439 = vcvt.s32.f32 %v375
        %v440 = vcvt.s32.f32 %v376
        %v441 = vcvt.s32.f32 %v377
        %v442 = vcvt.s32.f32 %v378
        %v443 = vcvt.s32.f32 %v379
        %v444 = vcvt.s32.f32 %v380
        %v445 = vcvt.s32.f32 %v381
        %v446 = vcvt.s32.f32 %v382
        %v447 = vcvt.s32.f32 %v383
        %v448 = vcvt.s32.f32 %v384
        %v449 = vcvt.s32.f32 %v385
        %v450 = vcvt.s32.f32 %v386
        %v451 = vcvt.s32.f32 %v387
        %v452 = vcvt.s32.f32 %v388
        %v453 = vcvt.s32.f32 %v389
        %v454 = vcvt.s32.f32 %v390
        %v455 = vcvt.s32.f32 %v391
        %v456 = vcvt.s32.f32 %v392
        %v457 = vcvt.s32.f32 %v393
        %v458 = vcvt.s32.f32 %v394
        %v459 = vcvt.s32.f32 %v395
        %v460 = vcvt.s32.f32 %v396
        %v461 = vcvt.s32.f32 %v397
        %v462 = vcvt.s32.f32 %v398
        %v463 = vcvt.s32.f32 %v399
        %v464 = vcvt.s32.f32 %v400
        %v465 = vcvt.s32.f32 %v401
        %v466 = vcvt.s32.f32 %v402
        %v467 = vcvt.s32.f32 %v403
        %v468 = vld [vmem:[%s1] sm:$0xff]
        %v469 = vld [vmem:[%s1 + $0x8] sm:$0xff]
        %v470 = vld [vmem:[%s1 + $0x10] sm:$0xff]
        %v471 = vld [vmem:[%s1 + $0x18] sm:$0xff]
        %v472 = vld [vmem:[%s1 + $0x20] sm:$0xff]
        %v473 = vld [vmem:[%s1 + $0x28] sm:$0xff]
        %v474 = vld [vmem:[%s1 + $0x30] sm:$0xff]
        %v475 = vld [vmem:[%s1 + $0x38] sm:$0xff]
        %v476 = vld [vmem:[%s1 + $0x40] sm:$0xff]
        %v477 = vld [vmem:[%s1 + $0x48] sm:$0xff]
        %v478 = vld [vmem:[%s1 + $0x50] sm:$0xff]
        %v479 = vld [vmem:[%s1 + $0x58] sm:$0xff]
        %v480 = vld [vmem:[%s1 + $0x60] sm:$0xff]
        %v481 = vld [vmem:[%s1 + $0x68] sm:$0xff]
        %v482 = vld [vmem:[%s1 + $0x70] sm:$0xff]
        %v483 = vld [vmem:[%s1 + $0x78] sm:$0xff]
        %v484 = vld [vmem:[%s1 + $0x80] sm:$0xff]
        %v485 = vld [vmem:[%s1 + $0x88] sm:$0xff]
        %v486 = vld [vmem:[%s1 + $0x90] sm:$0xff]
        %v487 = vld [vmem:[%s1 + $0x98] sm:$0xff]
        %v488 = vld [vmem:[%s1 + $0xa0] sm:$0xff]
        %v489 = vld [vmem:[%s1 + $0xa8] sm:$0xff]
        %v490 = vld [vmem:[%s1 + $0xb0] sm:$0xff]
        %v491 = vld [vmem:[%s1 + $0xb8] sm:$0xff]
        %v492 = vld [vmem:[%s1 + $0xc0] sm:$0xff]
        %v493 = vld [vmem:[%s1 + $0xc8] sm:$0xff]
        %v494 = vld [vmem:[%s1 + $0xd0] sm:$0xff]
        %v495 = vld [vmem:[%s1 + $0xd8] sm:$0xff]
        %v496 = vld [vmem:[%s1 + $0xe0] sm:$0xff]
        %v497 = vld [vmem:[%s1 + $0xe8] sm:$0xff]
        %v498 = vld [vmem:[%s1 + $0xf0] sm:$0xff]
        %v499 = vld [vmem:[%s1 + $0xf8] sm:$0xff]
        %500 = vmatprep.subr.mxu0 0.0
        %501 = vmatpush1.msra.mxu0 %v483
        %502 = vmatprep.subr.mxu0 0.0
        %503 = vmatpush1.msra.mxu0 %v482
        %504 = vmatprep.subr.mxu0 0.0
        %505 = vmatpush1.msra.mxu0 %v481
        %506 = vmatprep.subr.mxu0 0.0
        %507 = vmatpush1.msra.mxu0 %v480
        %508 = vmatprep.subr.mxu0 0.0
        %509 = vmatpush1.msra.mxu0 %v479
        %510 = vmatprep.subr.mxu0 0.0
        %511 = vmatpush1.msra.mxu0 %v478
        %512 = vmatprep.subr.mxu0 0.0
        %513 = vmatpush1.msra.mxu0 %v477
        %514 = vmatprep.subr.mxu0 0.0
        %515 = vmatpush1.msra.mxu0 %v476
        %516 = vmatprep.subr.mxu0 0.0
        %517 = vmatpush1.msra.mxu0 %v475
        %518 = vmatprep.subr.mxu0 0.0
        %519 = vmatpush1.msra.mxu0 %v474
        %520 = vmatprep.subr.mxu0 0.0
        %521 = vmatpush1.msra.mxu0 %v473
        %522 = vmatprep.subr.mxu0 0.0
        %523 = vmatpush1.msra.mxu0 %v472
        %524 = vmatprep.subr.mxu0 0.0
        %525 = vmatpush1.msra.mxu0 %v471
        %526 = vmatprep.subr.mxu0 0.0
        %527 = vmatpush1.msra.mxu0 %v470
        %528 = vmatprep.subr.mxu0 0.0
        %529 = vmatpush1.msra.mxu0 %v469
        %530 = vmatprep.subr.mxu0 0.0
        %531 = vmatpush1.msra.mxu0 %v468
        %532 = vmatprep.subr.mxu0 0.0
        %533 = vmatpush2.msra.mxu0 %v499
        %534 = vmatprep.subr.mxu0 0.0
        %535 = vmatpush2.msra.mxu0 %v498
        %536 = vmatprep.subr.mxu0 0.0
        %537 = vmatpush2.msra.mxu0 %v497
        %538 = vmatprep.subr.mxu0 0.0
        %539 = vmatpush2.msra.mxu0 %v496
        %540 = vmatprep.subr.mxu0 0.0
        %541 = vmatpush2.msra.mxu0 %v495
        %542 = vmatprep.subr.mxu0 0.0
        %543 = vmatpush2.msra.mxu0 %v494
        %544 = vmatprep.subr.mxu0 0.0
        %545 = vmatpush2.msra.mxu0 %v493
        %546 = vmatprep.subr.mxu0 0.0
        %547 = vmatpush2.msra.mxu0 %v492
        %548 = vmatprep.subr.mxu0 0.0
        %549 = vmatpush2.msra.mxu0 %v491
        %550 = vmatprep.subr.mxu0 0.0
        %551 = vmatpush2.msra.mxu0 %v490
        %552 = vmatprep.subr.mxu0 0.0
        %553 = vmatpush2.msra.mxu0 %v489
        %554 = vmatprep.subr.mxu0 0.0
        %555 = vmatpush2.msra.mxu0 %v488
        %556 = vmatprep.subr.mxu0 0.0
        %557 = vmatpush2.msra.mxu0 %v487
        %558 = vmatprep.subr.mxu0 0.0
        %559 = vmatpush2.msra.mxu0 %v486
        %560 = vmatprep.subr.mxu0 0.0
        %561 = vmatpush2.msra.mxu0 %v485
        %562 = vmatprep.subr.mxu0 0.0
        %563 = vmatpush2.msra.mxu0 %v484
        %564 = vmatprep.mubr.f32.mxu0 %v405
        %565 = vmatmul.mubr.f32.gmra.mxu0 %v404
        %v566 = vpop.f32.mrf.mxu0
        %v567 = vadd.f32 0.0, %v566
        %v568 = vpop.f32.mrf.mxu0
        %569 = vmatprep.mubr.f32.mxu0 %v407
        %570 = vmatmul.mubr.f32.gmra.mxu0 %v406
        %v571 = vpop.f32.mrf.mxu0
        %v572 = vadd.f32 0.0, %v571
        %v573 = vpop.f32.mrf.mxu0
        %574 = vmatprep.mubr.f32.mxu0 %v409
        %575 = vmatmul.mubr.f32.gmra.mxu0 %v408
        %v576 = vpop.f32.mrf.mxu0
        %v577 = vadd.f32 0.0, %v576
        %v578 = vpop.f32.mrf.mxu0
        %579 = vmatprep.mubr.f32.mxu0 %v411
        %580 = vmatmul.mubr.f32.gmra.mxu0 %v410
        %v581 = vpop.f32.mrf.mxu0
        %v582 = vadd.f32 0.0, %v581
        %v583 = vpop.f32.mrf.mxu0
        %584 = vmatprep.mubr.f32.mxu0 %v413
        %585 = vmatmul.mubr.f32.gmra.mxu0 %v412
        %v586 = vpop.f32.mrf.mxu0
        %v587 = vadd.f32 0.0, %v586
        %v588 = vpop.f32.mrf.mxu0
        %589 = vmatprep.mubr.f32.mxu0 %v415
        %590 = vmatmul.mubr.f32.gmra.mxu0 %v414
        %v591 = vpop.f32.mrf.mxu0
        %v592 = vadd.f32 0.0, %v591
        %v593 = vpop.f32.mrf.mxu0
        %594 = vmatprep.mubr.f32.mxu0 %v417
        %595 = vmatmul.mubr.f32.gmra.mxu0 %v416
        %v596 = vpop.f32.mrf.mxu0
        %v597 = vadd.f32 0.0, %v596
        %v598 = vpop.f32.mrf.mxu0
        %599 = vmatprep.mubr.f32.mxu0 %v419
        %600 = vmatmul.mubr.f32.gmra.mxu0 %v418
        %v601 = vpop.f32.mrf.mxu0
        %v602 = vadd.f32 0.0, %v601
        %v603 = vpop.f32.mrf.mxu0
        %604 = vmatprep.mubr.f32.mxu0 %v421
        %605 = vmatmul.mubr.f32.gmra.mxu0 %v420
        %v606 = vpop.f32.mrf.mxu0
        %v607 = vadd.f32 0.0, %v606
        %v608 = vpop.f32.mrf.mxu0
        %609 = vmatprep.mubr.f32.mxu0 %v423
        %610 = vmatmul.mubr.f32.gmra.mxu0 %v422
        %v611 = vpop.f32.mrf.mxu0
        %v612 = vadd.f32 0.0, %v611
        %v613 = vpop.f32.mrf.mxu0
        %614 = vmatprep.mubr.f32.mxu0 %v425
        %615 = vmatmul.mubr.f32.gmra.mxu0 %v424
        %v616 = vpop.f32.mrf.mxu0
        %v617 = vadd.f32 0.0, %v616
        %v618 = vpop.f32.mrf.mxu0
        %619 = vmatprep.mubr.f32.mxu0 %v427
        %620 = vmatmul.mubr.f32.gmra.mxu0 %v426
        %v621 = vpop.f32.mrf.mxu0
        %v622 = vadd.f32 0.0, %v621
        %v623 = vpop.f32.mrf.mxu0
        %624 = vmatprep.mubr.f32.mxu0 %v429
        %625 = vmatmul.mubr.f32.gmra.mxu0 %v428
        %v626 = vpop.f32.mrf.mxu0
        %v627 = vadd.f32 0.0, %v626
        %v628 = vpop.f32.mrf.mxu0
        %629 = vmatprep.mubr.f32.mxu0 %v431
        %630 = vmatmul.mubr.f32.gmra.mxu0 %v430
        %v631 = vpop.f32.mrf.mxu0
        %v632 = vadd.f32 0.0, %v631
        %v633 = vpop.f32.mrf.mxu0
        %634 = vmatprep.mubr.f32.mxu0 %v433
        %635 = vmatmul.mubr.f32.gmra.mxu0 %v432
        %v636 = vpop.f32.mrf.mxu0
        %v637 = vadd.f32 0.0, %v636
        %v638 = vpop.f32.mrf.mxu0
        %639 = vmatprep.mubr.f32.mxu0 %v435
        %640 = vmatmul.mubr.f32.gmra.mxu0 %v434
        %v641 = vpop.f32.mrf.mxu0
        %v642 = vadd.f32 0.0, %v641
        %v643 = vpop.f32.mrf.mxu0
        %644 = vmatprep.mubr.f32.mxu0 %v437
        %645 = vmatmul.mubr.f32.gmra.mxu0 %v436
        %v646 = vpop.f32.mrf.mxu0
        %v647 = vadd.f32 0.0, %v646
        %v648 = vpop.f32.mrf.mxu0
        %649 = vmatprep.mubr.f32.mxu0 %v439
        %650 = vmatmul.mubr.f32.gmra.mxu0 %v438
        %v651 = vpop.f32.mrf.mxu0
        %v652 = vadd.f32 0.0, %v651
        %v653 = vpop.f32.mrf.mxu0
        %654 = vmatprep.mubr.f32.mxu0 %v441
        %655 = vmatmul.mubr.f32.gmra.mxu0 %v440
        %v656 = vpop.f32.mrf.mxu0
        %v657 = vadd.f32 0.0, %v656
        %v658 = vpop.f32.mrf.mxu0
        %659 = vmatprep.mubr.f32.mxu0 %v443
        %660 = vmatmul.mubr.f32.gmra.mxu0 %v442
        %v661 = vpop.f32.mrf.mxu0
        %v662 = vadd.f32 0.0, %v661
        %v663 = vpop.f32.mrf.mxu0
        %664 = vmatprep.mubr.f32.mxu0 %v445
        %665 = vmatmul.mubr.f32.gmra.mxu0 %v444
        %v666 = vpop.f32.mrf.mxu0
        %v667 = vadd.f32 0.0, %v666
        %v668 = vpop.f32.mrf.mxu0
        %669 = vmatprep.mubr.f32.mxu0 %v447
        %670 = vmatmul.mubr.f32.gmra.mxu0 %v446
        %v671 = vpop.f32.mrf.mxu0
        %v672 = vadd.f32 0.0, %v671
        %v673 = vpop.f32.mrf.mxu0
        %674 = vmatprep.mubr.f32.mxu0 %v449
        %675 = vmatmul.mubr.f32.gmra.mxu0 %v448
        %v676 = vpop.f32.mrf.mxu0
        %v677 = vadd.f32 0.0, %v676
        %v678 = vpop.f32.mrf.mxu0
        %679 = vmatprep.mubr.f32.mxu0 %v451
        %680 = vmatmul.mubr.f32.gmra.mxu0 %v450
        %v681 = vpop.f32.mrf.mxu0
        %v682 = vadd.f32 0.0, %v681
        %v683 = vpop.f32.mrf.mxu0
        %684 = vmatprep.mubr.f32.mxu0 %v453
        %685 = vmatmul.mubr.f32.gmra.mxu0 %v452
        %v686 = vpop.f32.mrf.mxu0
        %v687 = vadd.f32 0.0, %v686
        %v688 = vpop.f32.mrf.mxu0
        %689 = vmatprep.mubr.f32.mxu0 %v455
        %690 = vmatmul.mubr.f32.gmra.mxu0 %v454
        %v691 = vpop.f32.mrf.mxu0
        %v692 = vadd.f32 0.0, %v691
        %v693 = vpop.f32.mrf.mxu0
        %694 = vmatprep.mubr.f32.mxu0 %v457
        %695 = vmatmul.mubr.f32.gmra.mxu0 %v456
        %v696 = vpop.f32.mrf.mxu0
        %v697 = vadd.f32 0.0, %v696
        %v698 = vpop.f32.mrf.mxu0
        %699 = vmatprep.mubr.f32.mxu0 %v459
        %700 = vmatmul.mubr.f32.gmra.mxu0 %v458
        %v701 = vpop.f32.mrf.mxu0
        %v702 = vadd.f32 0.0, %v701
        %v703 = vpop.f32.mrf.mxu0
        %704 = vmatprep.mubr.f32.mxu0 %v461
        %705 = vmatmul.mubr.f32.gmra.mxu0 %v460
        %v706 = vpop.f32.mrf.mxu0
        %v707 = vadd.f32 0.0, %v706
        %v708 = vpop.f32.mrf.mxu0
        %709 = vmatprep.mubr.f32.mxu0 %v463
        %710 = vmatmul.mubr.f32.gmra.mxu0 %v462
        %v711 = vpop.f32.mrf.mxu0
        %v712 = vadd.f32 0.0, %v711
        %v713 = vpop.f32.mrf.mxu0
        %714 = vmatprep.mubr.f32.mxu0 %v465
        %715 = vmatmul.mubr.f32.gmra.mxu0 %v464
        %v716 = vpop.f32.mrf.mxu0
        %v717 = vadd.f32 0.0, %v716
        %v718 = vpop.f32.mrf.mxu0
        %719 = vmatprep.mubr.f32.mxu0 %v467
        %720 = vmatmul.mubr.f32.gmra.mxu0 %v466
        %v721 = vpop.f32.mrf.mxu0
        %v722 = vadd.f32 0.0, %v721
        %v723 = vpop.f32.mrf.mxu0
        %724 = vdwg.mxu0
        %725 = vst [vmem:[%s137] sm:$0xff] %v567
        %726 = vst [vmem:[%s137 + $0x8] sm:$0xff] %v572
        %727 = vst [vmem:[%s137 + $0x10] sm:$0xff] %v577
        %728 = vst [vmem:[%s137 + $0x18] sm:$0xff] %v582
        %729 = vst [vmem:[%s137 + $0x20] sm:$0xff] %v587
        %730 = vst [vmem:[%s137 + $0x28] sm:$0xff] %v592
        %731 = vst [vmem:[%s137 + $0x30] sm:$0xff] %v597
        %732 = vst [vmem:[%s137 + $0x38] sm:$0xff] %v602
        %733 = vst [vmem:[%s137 + $0x40] sm:$0xff] %v607
        %734 = vst [vmem:[%s137 + $0x48] sm:$0xff] %v612
        %735 = vst [vmem:[%s137 + $0x50] sm:$0xff] %v617
        %736 = vst [vmem:[%s137 + $0x58] sm:$0xff] %v622
        %737 = vst [vmem:[%s137 + $0x60] sm:$0xff] %v627
        %738 = vst [vmem:[%s137 + $0x68] sm:$0xff] %v632
        %739 = vst [vmem:[%s137 + $0x70] sm:$0xff] %v637
        %740 = vst [vmem:[%s137 + $0x78] sm:$0xff] %v642
        %741 = vst [vmem:[%s137 + $0x80] sm:$0xff] %v647
        %742 = vst [vmem:[%s137 + $0x88] sm:$0xff] %v652
        %743 = vst [vmem:[%s137 + $0x90] sm:$0xff] %v657
        %744 = vst [vmem:[%s137 + $0x98] sm:$0xff] %v662
        %745 = vst [vmem:[%s137 + $0xa0] sm:$0xff] %v667
        %746 = vst [vmem:[%s137 + $0xa8] sm:$0xff] %v672
        %747 = vst [vmem:[%s137 + $0xb0] sm:$0xff] %v677
        %748 = vst [vmem:[%s137 + $0xb8] sm:$0xff] %v682
        %749 = vst [vmem:[%s137 + $0xc0] sm:$0xff] %v687
        %750 = vst [vmem:[%s137 + $0xc8] sm:$0xff] %v692
        %751 = vst [vmem:[%s137 + $0xd0] sm:$0xff] %v697
        %752 = vst [vmem:[%s137 + $0xd8] sm:$0xff] %v702
        %753 = vst [vmem:[%s137 + $0xe0] sm:$0xff] %v707
        %754 = vst [vmem:[%s137 + $0xe8] sm:$0xff] %v712
        %755 = vst [vmem:[%s137 + $0xf0] sm:$0xff] %v717
        %756 = vst [vmem:[%s137 + $0xf8] sm:$0xff] %v722
        %s757 = sand.u32 %s71, 1
        %s758 = scalar_lea.sflag [#allocation3], %s757
        %s759 = sand.u32 %s71, 1
        %s760 = smul.addr %s759, 256
        %s761 = scalar_lea.vmem [#allocation2], %s760
        // Predicated region
        $region29: #{tpu_custom_call.1} parent=27 // pred_check
          %p762 = pneg %p81
        $region30: #{tpu_custom_call.1} parent=27 // pred_check_branch
          %764 = sbr.rel (%p762) target = $region32
        $region31: #{tpu_custom_call.1} parent=27 // pred_region
          %s765 = smul.u32 32, %s16
          %s767 = ssub.s32 4096, 4096
          %768 = vsyncadd %s758, %s767
          %s769 = smul.addr %s765, 128
          %s770 = scalar_lea.hbm %s2, %s769
          %s771 = sshll.u32 %s761, 4
          %s772 = int_to_ptr.vmem [resolvable:$true] %s771
          %777 = dma.vmem_to_hbm [thread:$0]  %s772, 4096, %s770, %s758, 128, 128, 8
        $region32: #{tpu_custom_call.1} parent=27 // pred_fallthru
          _
      $region28: #{tpu_custom_call.1} parent=5 // pred_fallthru
        _
      %p778 = scmp.le.s32.totalorder 2, %s11
      // Predicated region
      $region33: #{tpu_custom_call.1} parent=5 // pred_check
        %p779 = pneg %p778
      $region34: #{tpu_custom_call.1} parent=5 // pred_check_branch
        %781 = sbr.rel (%p779) target = $region36
      $region35: #{tpu_custom_call.1} parent=5 // pred_region
        %s782 = ssub.s32 %s11, 2
        // Predicated region
        $region37: #{tpu_custom_call.1} parent=35 // pred_check
          %p783 = pneg %p87
        $region38: #{tpu_custom_call.1} parent=35 // pred_check_branch
          %785 = sbr.rel (%p783) target = $region40
        $region39: #{tpu_custom_call.1} parent=35 // pred_region
          %s786 = sand.u32 %s72, 1
          %s787 = scalar_lea.sflag [#allocation3], %s786
          %s788 = sand.u32 %s72, 1
          %s789 = smul.addr %s788, 256
          %s790 = scalar_lea.vmem [#allocation2], %s789
          %791 = dma.done %s787, 4096
        $region40: #{tpu_custom_call.1} parent=35 // pred_fallthru
          _
      $region36: #{tpu_custom_call.1} parent=5 // pred_fallthru
        _
    $region6: #{tpu_custom_call.1} parent=1 // loop_footer
      %s15 = sadd.s32 1, %s11
    $region7: #{tpu_custom_call.1} parent=1 // loop_footer_branch
      %10 = sbr.rel target = $region3
    $region8: #{tpu_custom_call.1} parent=1 // loop_exit
      _
    %792 = vsyncpa [#allocation3], 1
    %s793 = scalar_lea.sflag [#allocation3], 1
    %794 = vsyncpa %s793, 1

</llo_original>
